<compile_context>
chip_gen: v7x
topology: tpu7x:2x2x1
jax: 0.10.0
libtpu: 0.0.40
codegen_flags: <defaults>
</compile_context>

<pallas_src>
import jax
import jax.numpy as jnp
from jax import lax
from jax.experimental import pallas as pl
from jax.experimental.pallas import tpu as pltpu


def bias_free_layernorm_kernel(x_ref, w_ref, o_ref):
    # x_ref: (Bt, C, Thw)   w_ref: (C, 1)   o_ref: (Bt, C, Thw)
    x = x_ref[...].astype(jnp.float32)                       # (Bt, C, Thw)
    c = x.shape[1]
    inv_c = jnp.float32(1.0 / c)

    # One-pass statistics over the channel (sublane) axis.
    s1 = jnp.sum(x, axis=1, keepdims=True)                   # (Bt, 1, Thw)
    s2 = jnp.sum(x * x, axis=1, keepdims=True)               # (Bt, 1, Thw)
    mean = s1 * inv_c
    var = jnp.maximum(s2 * inv_c - mean * mean, 0.0)         # clamp: cancellation guard
    inv = lax.rsqrt(var + jnp.float32(1e-5))                 # EUP slot

    w = w_ref[...].astype(jnp.float32)                       # (C, 1)
    # NOTE: bias-free LayerNorm scales the *un-centered* x (matches PyTorch spec).
    # Re-read x_ref for the scale pass instead of keeping the reduction operand live.
    o_ref[...] = (x_ref[...].astype(jnp.float32) * inv * w[None, :, :]).astype(o_ref.dtype)


def _round_up(n, m):
    return ((n + m - 1) // m) * m


def layernorm_nchw(x_nchw, weight, *, batch_tile=None, hw_tile=None):
    """x_nchw: (B, C, H, W).  weight: (C,).  Returns (B, C, H, W)."""
    B, C, H, W = x_nchw.shape
    HW = H * W
    itemsize = jnp.dtype(x_nchw.dtype).itemsize

    # --- HW tile: lane axis must be a multiple of 128; cap block size so VMEM
    # residency is bounded independently of the image size. ---
    if hw_tile is None:
        hw_tile = min(_round_up(HW, 128), 2048)
    hw_tile = _round_up(hw_tile, 128)
    HW_pad = _round_up(HW, hw_tile)
    num_hw_blocks = HW_pad // hw_tile

    # --- batch tile: biggest that (a) divides B, (b) keeps double-buffered
    # (in + out) blocks under ~12 MiB (fits v5e's 16 MiB default scoped VMEM,
    # and trivially v6e/v7x), and (c) does not collapse the grid to 1 step. ---
    max_block_elems = (12 * 1024 * 1024) // (4 * itemsize)   # 2 bufs x (in + out)
    if batch_tile is None:
        batch_tile = 1
        for cand in (8, 4, 2, 1):
            if B % cand != 0:
                continue
            if cand * C * hw_tile > max_block_elems:
                continue
            if cand > 1 and (B // cand) * num_hw_blocks < 2:
                continue                                      # keep >= 2 grid steps
            batch_tile = cand
            break
    assert B % batch_tile == 0
    num_b_blocks = B // batch_tile

    # Channels-first, HW on the lane axis; pad lanes to a multiple of hw_tile.
    x3 = x_nchw.reshape(B, C, HW)
    if HW_pad != HW:
        x3 = jnp.pad(x3, ((0, 0), (0, 0), (0, HW_pad - HW)))
    w2 = weight.reshape(C, 1)

    cost = pl.CostEstimate(
        flops=5 * B * C * HW_pad,
        transcendentals=B * HW_pad,
        bytes_accessed=2 * B * C * HW_pad * itemsize + C * itemsize,
    )

    out = pl.pallas_call(
        bias_free_layernorm_kernel,
        out_shape=jax.ShapeDtypeStruct((B, C, HW_pad), x_nchw.dtype),
        grid_spec=pltpu.PrefetchScalarGridSpec(
            num_scalar_prefetch=0,
            grid=(num_b_blocks, num_hw_blocks),
            in_specs=[
                pl.BlockSpec((batch_tile, C, hw_tile), lambda b, h: (b, 0, h)),
                pl.BlockSpec((C, 1), lambda b, h: (0, 0)),
            ],
            out_specs=pl.BlockSpec((batch_tile, C, hw_tile), lambda b, h: (b, 0, h)),
        ),
        compiler_params=pltpu.CompilerParams(
            dimension_semantics=("parallel", "parallel"),
        ),
        cost_estimate=cost,
    )(x3, w2)

    if HW_pad != HW:
        out = out[:, :, :HW]
    return out.reshape(B, C, H, W)


def reference_layernorm(x_nchw, weight):
    """Pure-JAX mirror of the PyTorch forward: to_3d -> BiasFree_LayerNorm -> to_4d."""
    B, C, H, W = x_nchw.shape
    x3 = jnp.transpose(x_nchw.reshape(B, C, H * W), (0, 2, 1))   # (B, HW, C)
    sigma = jnp.var(x3, axis=-1, keepdims=True)                  # unbiased=False
    y = x3 / jnp.sqrt(sigma + 1e-5) * weight
    return jnp.transpose(y, (0, 2, 1)).reshape(B, C, H, W)


if __name__ == "__main__":
    key = jax.random.PRNGKey(0)
    kx1, kx2, kw1, kw2 = jax.random.split(key, 4)

    # Case 1: 128-aligned spatial size (no padding path).
    B, C, H, W = 2, 32, 16, 16
    x = jax.random.normal(kx1, (B, C, H, W), jnp.float32)
    weight = 1.0 + 0.1 * jax.random.normal(kw1, (C,), jnp.float32)
    out = jax.block_until_ready(layernorm_nchw(x, weight))
    ref = reference_layernorm(x, weight)
    assert jnp.allclose(out, ref, rtol=1e-5, atol=1e-5), float(jnp.max(jnp.abs(out - ref)))

    # Case 2: non-128-aligned spatial size (exercises the lane-padding path).
    B2, C2, H2, W2 = 2, 16, 10, 12
    x2 = jax.random.normal(kx2, (B2, C2, H2, W2), jnp.float32)
    weight2 = 1.0 + 0.1 * jax.random.normal(kw2, (C2,), jnp.float32)
    out2 = jax.block_until_ready(layernorm_nchw(x2, weight2))
    ref2 = reference_layernorm(x2, weight2)
    assert jnp.allclose(out2, ref2, rtol=1e-5, atol=1e-5), float(jnp.max(jnp.abs(out2 - ref2)))

    print("KERNEL_OK")
</pallas_src>

<mosaic_0001>
module attributes {stable_mosaic.version = 11 : i64} {
  func.func @bias_free_layernorm_kernel(%arg0: i32, %arg1: i32, %arg2: memref<1x32x256xf32, #tpu.memory_space<vmem>>, %arg3: memref<32x1xf32, #tpu.memory_space<vmem>>, %arg4: memref<1x32x256xf32, #tpu.memory_space<vmem>>) attributes {dimension_semantics = [#tpu.dimension_semantics<parallel>, #tpu.dimension_semantics<parallel>], iteration_bounds = array<i64: 2, 1>, scalar_prefetch = 0 : i64, scratch_operands = 0 : i64, tpu.core_type = #tpu.core_type<tc>, window_params = [{transform_indices = @transform_0, window_bounds = array<i64: 1, 32, 256>}, {pipeline_mode = #tpu.pipeline_mode<synchronous>, transform_indices = @transform_1, window_bounds = array<i64: 32, 1>}, {transform_indices = @transform_2, window_bounds = array<i64: 1, 32, 256>}]} {
    %c0 = arith.constant 0 : index
    %c0_0 = arith.constant 0 : index
    %c0_1 = arith.constant 0 : index
    %0 = vector.load %arg2[%c0, %c0_0, %c0_1] : memref<1x32x256xf32, #tpu.memory_space<vmem>>, vector<1x32x256xf32>
    %cst = arith.constant dense<0.000000e+00> : vector<1x256xf32>
    %1 = vector.multi_reduction <add>, %0, %cst [1] : vector<1x32x256xf32> to vector<1x256xf32>
    %2 = vector.shape_cast %1 : vector<1x256xf32> to vector<1x1x256xf32>
    %3 = arith.mulf %0, %0 : vector<1x32x256xf32>
    %cst_2 = arith.constant dense<0.000000e+00> : vector<1x256xf32>
    %4 = vector.multi_reduction <add>, %3, %cst_2 [1] : vector<1x32x256xf32> to vector<1x256xf32>
    %5 = vector.shape_cast %4 : vector<1x256xf32> to vector<1x1x256xf32>
    %cst_3 = arith.constant 3.125000e-02 : f32
    %6 = vector.broadcast %cst_3 : f32 to vector<1x1x256xf32>
    %7 = arith.mulf %2, %6 : vector<1x1x256xf32>
    %cst_4 = arith.constant 3.125000e-02 : f32
    %8 = vector.broadcast %cst_4 : f32 to vector<1x1x256xf32>
    %9 = arith.mulf %5, %8 : vector<1x1x256xf32>
    %10 = arith.mulf %7, %7 : vector<1x1x256xf32>
    %11 = arith.subf %9, %10 : vector<1x1x256xf32>
    %cst_5 = arith.constant 0.000000e+00 : f32
    %12 = vector.broadcast %cst_5 : f32 to vector<1x1x256xf32>
    %13 = arith.maximumf %11, %12 : vector<1x1x256xf32>
    %cst_6 = arith.constant 9.99999974E-6 : f32
    %14 = vector.broadcast %cst_6 : f32 to vector<1x1x256xf32>
    %15 = arith.addf %13, %14 : vector<1x1x256xf32>
    %16 = math.rsqrt %15 : vector<1x1x256xf32>
    %c0_7 = arith.constant 0 : index
    %c0_8 = arith.constant 0 : index
    %17 = vector.load %arg3[%c0_7, %c0_8] : memref<32x1xf32, #tpu.memory_space<vmem>>, vector<32x1xf32>
    %c0_9 = arith.constant 0 : index
    %c0_10 = arith.constant 0 : index
    %c0_11 = arith.constant 0 : index
    %18 = vector.load %arg2[%c0_9, %c0_10, %c0_11] : memref<1x32x256xf32, #tpu.memory_space<vmem>>, vector<1x32x256xf32>
    %19 = vector.broadcast %16 : vector<1x1x256xf32> to vector<1x32x256xf32>
    %20 = arith.mulf %18, %19 : vector<1x32x256xf32>
    %21 = vector.shape_cast %17 : vector<32x1xf32> to vector<1x32x1xf32>
    %22 = vector.broadcast %21 : vector<1x32x1xf32> to vector<1x32x256xf32>
    %23 = arith.mulf %20, %22 : vector<1x32x256xf32>
    %c0_12 = arith.constant 0 : index
    %c0_13 = arith.constant 0 : index
    %c0_14 = arith.constant 0 : index
    %24 = vector.load %arg4[%c0_12, %c0_13, %c0_14] : memref<1x32x256xf32, #tpu.memory_space<vmem>>, vector<1x32x256xf32>
    tpu.vector_store %arg4[%c0_12, %c0_13, %c0_14], %23 {strides = array<i32>} : memref<1x32x256xf32, #tpu.memory_space<vmem>>, vector<1x32x256xf32>,
    return
  }
  func.func @transform_0(%arg0: i32, %arg1: i32) -> (i32, i32, i32) {
    %c0_i32 = arith.constant 0 : i32
    %c0_i32_0 = arith.constant 0 : i32
    return %arg0, %c0_i32, %arg1 : i32, i32, i32
  }
  func.func @transform_1(%arg0: i32, %arg1: i32) -> (i32, i32) {
    %c0_i32 = arith.constant 0 : i32
    %c0_i32_0 = arith.constant 0 : i32
    %c0_i32_1 = arith.constant 0 : i32
    return %c0_i32, %c0_i32_0 : i32, i32
  }
  func.func @transform_2(%arg0: i32, %arg1: i32) -> (i32, i32, i32) {
    %c0_i32 = arith.constant 0 : i32
    %c0_i32_0 = arith.constant 0 : i32
    return %arg0, %c0_i32, %arg1 : i32, i32, i32
  }
}

</mosaic_0001>

<llo_original>
// kernel: tpu_custom_call.1
$region0: #{tpu_custom_call.1}
  #allocation0 [shape = 'u32[]', space=smem, size = 0x4, offset = 0x4, fixed_abs, tag = 'smem constant byte address 0x4 - core index']
  #allocation1 [shape = 'u32[144,128]{1,0:T(1,128)}', space=vmem, size = 0x12000, scoped, tag = 'internal scratch']
  %s0 = inlined_call_operand.hbm [shape: f32[2,32,256], index: 0, kind: input, shape index: {}]
  %s1 = inlined_call_operand.vmem [shape: f32[32,1], index: 1, kind: input, shape index: {}]
  %s2 = inlined_call_operand.hbm [shape: f32[2,32,256], index: 2, kind: output, shape index: {}]
  %s3 = sld [smem:[#allocation0]]
  $region45: #{tpu_custom_call.1} parent=0
    _
  %s5 = ssub.s32 1, %s3
  %s6 = scalar_select 0, %s5, %s3
  $region1: #{tpu_custom_call.1} parent=0
    #allocation2 [shape = 'u8[65536]{0}', space=vmem, size = 0x10000, scoped, tag = 'input window, operand 0']
    #allocation3 [shape = 's32[2]{0}', space=sflag, size = 0x8, scoped, tag = 'scoped memory for tpu_custom_call.1']
    #allocation4 [shape = 's32[2]{0}', space=sflag, size = 0x8, scoped, tag = 'scoped memory for tpu_custom_call.1']
    #allocation5 [shape = 'u8[65536]{0}', space=vmem, size = 0x10000, scoped, tag = 'output window, operand 0']
    %7 = vsyncpa [#allocation3], 0
    %s8 = scalar_lea.sflag [#allocation3], 1
    %9 = vsyncpa %s8, 0
    %10 = vsyncpa [#allocation4], 0
    %s11 = scalar_lea.sflag [#allocation4], 1
    %12 = vsyncpa %s11, 0
    loop: start=0, step=1, limit=4
    $region2: #{tpu_custom_call.1} parent=1 // loop_pre_header
      _
    $region3: #{tpu_custom_call.1} parent=1 // loop_header
      %s14 = sphi 0, %s18
      %p15 = scmp.ge.s32.totalorder %s14, 4
      %s21 = sphi 0, %s33
      %s22 = sphi 0, %s29
      %s23 = sphi 0, %s21
      %s24 = sphi 0, %s22
      %s25 = sphi 0, %s23
      %s26 = sphi 0, %s24
      %s38 = sphi 0, %s40
      %s41 = sphi 0, %s38
      %s42 = sphi 0, %s41
      %s58 = sphi 0, %s42
      %s62 = sphi 0, %s62
      %s64 = sphi 0, %s62
      %s65 = sphi 0, %s64
      %s79 = sphi 0, %s65
      %s87 = sphi 0, %s89
      %s90 = sphi 0, %s87
      %s91 = sphi 0, %s90
      %s107 = sphi 0, %s91
    $region4: #{tpu_custom_call.1} parent=1 // loop_header_branch
      %17 = sbr.rel (%p15) target = $region8
    $region5: #{tpu_custom_call.1} parent=1 // loop_body
      %s19 = ssub.s32 %s14, 1
      %s20 = ssub.s32 %s14, 2
      %s27 = sadd.s32 1, %s22
      %p28 = scmp.ge.s32.totalorder %s27, 1
      %s29 = scalar_select %p28, 0, %s27
      %s30 = sadd.s32 1, %s21
      %s31 = scalar_select %p28, %s30, %s21
      %p32 = scmp.ge.s32.totalorder %s31, 2
      %s33 = scalar_select %p32, 0, %s31
      %s34 = ssub.s32 %s21, %s33
      %s35 = ssub.s32 %s22, %s29
      %s36 = sor.u32 %s34, %s35
      %p37 = scmp.eq.s32.totalorder %s36, 0
      %s39 = sadd.s32 %s38, 1
      %s40 = scalar_select %p37, %s38, %s39
      %p43 = pneg %p37
      %p44 = scmp.eq.s32.totalorder %s14, 1
      %p45 = por %p43, %p44
      %p46 = scmp.ne.s32.totalorder %s38, %s41
      %p47 = scmp.eq.s32.totalorder %s14, 0
      %p48 = por %p46, %p47
      %p49 = scmp.ne.s32.totalorder %s38, %s41
      %p50 = scmp.eq.s32.totalorder %s19, 1
      %p51 = por %p49, %p50
      %p52 = scmp.ne.s32.totalorder %s41, %s42
      %p53 = scmp.eq.s32.totalorder %s19, 0
      %p54 = por %p52, %p53
      %p55 = scmp.ne.s32.totalorder %s41, %s42
      %p56 = scmp.eq.s32.totalorder %s20, 1
      %p57 = por %p55, %p56
      %p59 = scmp.ne.s32.totalorder %s42, %s58
      %p60 = scmp.eq.s32.totalorder %s20, 0
      %p61 = por %p59, %p60
      %s63 = sadd.s32 %s62, 1
      %p66 = scmp.eq.s32.totalorder %s14, 1
      %p67 = scmp.ne.s32.totalorder %s62, %s64
      %p68 = scmp.eq.s32.totalorder %s14, 0
      %p69 = por %p67, %p68
      %p70 = scmp.ne.s32.totalorder %s62, %s64
      %p71 = scmp.eq.s32.totalorder %s19, 1
      %p72 = por %p70, %p71
      %p73 = scmp.ne.s32.totalorder %s64, %s65
      %p74 = scmp.eq.s32.totalorder %s19, 0
      %p75 = por %p73, %p74
      %p76 = scmp.ne.s32.totalorder %s64, %s65
      %p77 = scmp.eq.s32.totalorder %s20, 1
      %p78 = por %p76, %p77
      %p80 = scmp.ne.s32.totalorder %s65, %s79
      %p81 = scmp.eq.s32.totalorder %s20, 0
      %p82 = por %p80, %p81
      %s83 = ssub.s32 %s21, %s33
      %s84 = ssub.s32 %s22, %s29
      %s85 = sor.u32 %s83, %s84
      %p86 = scmp.eq.s32.totalorder %s85, 0
      %s88 = sadd.s32 %s87, 1
      %s89 = scalar_select %p86, %s87, %s88
      %p92 = pneg %p86
      %p93 = scmp.eq.s32.totalorder %s14, 1
      %p94 = por %p92, %p93
      %p95 = scmp.ne.s32.totalorder %s87, %s90
      %p96 = scmp.eq.s32.totalorder %s14, 0
      %p97 = por %p95, %p96
      %p98 = scmp.ne.s32.totalorder %s87, %s90
      %p99 = scmp.eq.s32.totalorder %s19, 1
      %p100 = por %p98, %p99
      %p101 = scmp.ne.s32.totalorder %s90, %s91
      %p102 = scmp.eq.s32.totalorder %s19, 0
      %p103 = por %p101, %p102
      %p104 = scmp.ne.s32.totalorder %s90, %s91
      %p105 = scmp.eq.s32.totalorder %s20, 1
      %p106 = por %p104, %p105
      %p108 = scmp.ne.s32.totalorder %s91, %s107
      %p109 = scmp.eq.s32.totalorder %s20, 0
      %p110 = por %p108, %p109
      %p111 = scmp.le.s32.totalorder 1, %s14
      %p112 = scmp.lt.s32.totalorder %s14, 3
      %p113 = pnand %p111, %p112
      %p114 = pneg %p113
      // Predicated region
      $region9: #{tpu_custom_call.1} parent=5 // pred_check
        _
      $region10: #{tpu_custom_call.1} parent=5 // pred_check_branch
        %116 = sbr.rel (%p113) target = $region12
      $region11: #{tpu_custom_call.1} parent=5 // pred_region
        %s117 = ssub.s32 %s14, 1
        // Predicated region
        $region13: #{tpu_custom_call.1} parent=11 // pred_check
          %p118 = pneg %p75
        $region14: #{tpu_custom_call.1} parent=11 // pred_check_branch
          %120 = sbr.rel (%p118) target = $region16
        $region15: #{tpu_custom_call.1} parent=11 // pred_region
          _
        $region16: #{tpu_custom_call.1} parent=11 // pred_fallthru
          _
      $region12: #{tpu_custom_call.1} parent=5 // pred_fallthru
        _
      %p121 = scmp.lt.s32.totalorder %s14, 2
      // Predicated region
      $region17: #{tpu_custom_call.1} parent=5 // pred_check
        %p122 = pneg %p121
      $region18: #{tpu_custom_call.1} parent=5 // pred_check_branch
        %124 = sbr.rel (%p122) target = $region20
      $region19: #{tpu_custom_call.1} parent=5 // pred_region
        // Predicated region
        $region21: #{tpu_custom_call.1} parent=19 // pred_check
          %p125 = pneg %p48
        $region22: #{tpu_custom_call.1} parent=19 // pred_check_branch
          %127 = sbr.rel (%p125) target = $region24
        $region23: #{tpu_custom_call.1} parent=19 // pred_region
          %s128 = sand.u32 %s38, 1
          %s129 = scalar_lea.sflag [#allocation3], %s128
          %s130 = sand.u32 %s38, 1
          %s131 = smul.addr %s130, 64
          %s132 = scalar_lea.vmem [#allocation2], %s131
          %s133 = smul.u32 2, %s22
          %s135 = ssub.s32 1024, 1024
          %136 = vsyncadd %s129, %s135
          %s137 = smul.addr %s21, 8
          %s138 = sadd.s32 %s133, %s137
          %s139 = smul.addr %s138, 128
          %s140 = scalar_lea.hbm %s0, %s139
          %s141 = sshll.u32 %s132, 4
          %s142 = int_to_ptr.vmem [resolvable:$true] %s141
          %147 = dma.hbm_to_vmem [thread:$0]  %s140, 1024, %s142, %s129, 256, 256, 16
        $region24: #{tpu_custom_call.1} parent=19 // pred_fallthru
          _
      $region20: #{tpu_custom_call.1} parent=5 // pred_fallthru
        _
      %p148 = scmp.le.s32.totalorder 1, %s14
      %p149 = scmp.lt.s32.totalorder %s14, 3
      %p150 = pnand %p148, %p149
      %p151 = pneg %p150
      // Predicated region
      $region25: #{tpu_custom_call.1} parent=5 // pred_check
        _
      $region26: #{tpu_custom_call.1} parent=5 // pred_check_branch
        %153 = sbr.rel (%p150) target = $region28
      $region27: #{tpu_custom_call.1} parent=5 // pred_region
        %s154 = ssub.s32 %s14, 1
        %s155 = sand.u32 %s41, 1
        %s156 = scalar_lea.sflag [#allocation3], %s155
        %s157 = sand.u32 %s41, 1
        %s158 = smul.addr %s157, 64
        %s159 = scalar_lea.vmem [#allocation2], %s158
        // Predicated region
        $region29: #{tpu_custom_call.1} parent=27 // pred_check
          %p160 = pneg %p54
        $region30: #{tpu_custom_call.1} parent=27 // pred_check_branch
          %162 = sbr.rel (%p160) target = $region32
        $region31: #{tpu_custom_call.1} parent=27 // pred_region
          %163 = dma.done %s156, 1024
        $region32: #{tpu_custom_call.1} parent=27 // pred_fallthru
          _
        %s164 = sand.u32 %s41, 1
        %s165 = scalar_lea.sflag [#allocation3], %s164
        %s166 = sand.u32 %s41, 1
        %s167 = smul.addr %s166, 64
        %s168 = scalar_lea.vmem [#allocation2], %s167
        %p169 = pneg %p54
        %p170 = pneg %p51
        %p171 = pneg %p75
        %p172 = pneg %p72
        %p173 = pneg %p103
        %p174 = pneg %p100
        %s175 = sand.u32 %s90, 1
        %s176 = scalar_lea.sflag [#allocation4], %s175
        %s177 = sand.u32 %s90, 1
        %s178 = smul.addr %s177, 64
        %s179 = scalar_lea.vmem [#allocation5], %s178
        %s180 = smul.u32 2, %s24
        %s181 = smul.u32 2, %s24
        %v182 = vld [vmem:[%s159] sm:$0xff]
        %v183 = vld [vmem:[%s159 + $0x8] sm:$0xff]
        %v184 = vld [vmem:[%s159 + $0x10] sm:$0xff]
        %v185 = vld [vmem:[%s159 + $0x18] sm:$0xff]
        %v186 = vld [vmem:[%s159 + $0x20] sm:$0xff]
        %v187 = vld [vmem:[%s159 + $0x28] sm:$0xff]
        %v188 = vld [vmem:[%s159 + $0x30] sm:$0xff]
        %v189 = vld [vmem:[%s159 + $0x38] sm:$0xff]
        %v190 = vadd.f32 %v182, %v184
        %v191 = vadd.f32 %v190, %v186
        %v192 = vadd.f32 %v191, %v188
        %v193 = vrot.slane %v192, 4
        %v194 = vadd.f32 %v192, %v193
        %v195 = vrot.slane %v194, 2
        %v196 = vadd.f32 %v194, %v195
        %v197 = vrot.slane %v196, 1
        %v198 = vadd.f32 %v196, %v197
        %v199 = vadd.f32 %v183, %v185
        %v200 = vadd.f32 %v199, %v187
        %v201 = vadd.f32 %v200, %v189
        %v202 = vrot.slane %v201, 4
        %v203 = vadd.f32 %v201, %v202
        %v204 = vrot.slane %v203, 2
        %v205 = vadd.f32 %v203, %v204
        %v206 = vrot.slane %v205, 1
        %v207 = vadd.f32 %v205, %v206
        %v208 = vmul.f32 %v182, %v182
        %v209 = vmul.f32 %v183, %v183
        %v210 = vmul.f32 %v184, %v184
        %v211 = vmul.f32 %v185, %v185
        %v212 = vmul.f32 %v186, %v186
        %v213 = vmul.f32 %v187, %v187
        %v214 = vmul.f32 %v188, %v188
        %v215 = vmul.f32 %v189, %v189
        %v216 = vadd.f32 %v208, %v210
        %v217 = vadd.f32 %v216, %v212
        %v218 = vadd.f32 %v217, %v214
        %v219 = vrot.slane %v218, 4
        %v220 = vadd.f32 %v218, %v219
        %v221 = vrot.slane %v220, 2
        %v222 = vadd.f32 %v220, %v221
        %v223 = vrot.slane %v222, 1
        %v224 = vadd.f32 %v222, %v223
        %v225 = vadd.f32 %v209, %v211
        %v226 = vadd.f32 %v225, %v213
        %v227 = vadd.f32 %v226, %v215
        %v228 = vrot.slane %v227, 4
        %v229 = vadd.f32 %v227, %v228
        %v230 = vrot.slane %v229, 2
        %v231 = vadd.f32 %v229, %v230
        %v232 = vrot.slane %v231, 1
        %v233 = vadd.f32 %v231, %v232
        %v234 = vmul.f32 %v198, 0.03125
        %v235 = vmul.f32 %v207, 0.03125
        %v236 = vmul.f32 %v224, 0.03125
        %v237 = vmul.f32 %v233, 0.03125
        %v238 = vmul.f32 %v234, %v234
        %v239 = vmul.f32 %v235, %v235
        %v240 = vsub.f32 %v236, %v238
        %v241 = vsub.f32 %v237, %v239
        %v242 = vmax.f32 %v240, 0.0
        %v243 = vmax.f32 %v241, 0.0
        %v244 = vadd.f32 %v242, 1e-05
        %v245 = vadd.f32 %v243, 1e-05
        %v246 = vrsqrt.pop %v244
        %v247 = vrsqrt.pop %v245
        %v248 = vld [vmem:[%s1] sm:$0xff]
        %v249 = vld [vmem:[%s1 + $0x8] sm:$0xff]
        %v250 = vld [vmem:[%s1 + $0x10] sm:$0xff]
        %v251 = vld [vmem:[%s1 + $0x18] sm:$0xff]
        %v252 = vmul.f32 %v182, %v246
        %v253 = vmul.f32 %v183, %v247
        %v254 = vmul.f32 %v184, %v246
        %v255 = vmul.f32 %v185, %v247
        %v256 = vmul.f32 %v186, %v246
        %v257 = vmul.f32 %v187, %v247
        %v258 = vmul.f32 %v188, %v246
        %v259 = vmul.f32 %v189, %v247
        %261 = vset.pattern.permute.xlu0 0
        %262 = vperm.xlu0 %261, %v248
        %v263 = vpop.permute.xlu0 %262
        %266 = vset.pattern.permute.xlu0 0
        %267 = vperm.xlu0 %266, %v249
        %v268 = vpop.permute.xlu0 %267
        %271 = vset.pattern.permute.xlu0 0
        %272 = vperm.xlu0 %271, %v250
        %v273 = vpop.permute.xlu0 %272
        %276 = vset.pattern.permute.xlu0 0
        %277 = vperm.xlu0 %276, %v251
        %v278 = vpop.permute.xlu0 %277
        %v280 = vmul.f32 %v252, %v263
        %v281 = vmul.f32 %v253, %v263
        %v282 = vmul.f32 %v254, %v268
        %v283 = vmul.f32 %v255, %v268
        %v284 = vmul.f32 %v256, %v273
        %v285 = vmul.f32 %v257, %v273
        %v286 = vmul.f32 %v258, %v278
        %v287 = vmul.f32 %v259, %v278
        %288 = vst [vmem:[%s179] sm:$0xff] %v280
        %289 = vst [vmem:[%s179 + $0x8] sm:$0xff] %v281
        %290 = vst [vmem:[%s179 + $0x10] sm:$0xff] %v282
        %291 = vst [vmem:[%s179 + $0x18] sm:$0xff] %v283
        %292 = vst [vmem:[%s179 + $0x20] sm:$0xff] %v284
        %293 = vst [vmem:[%s179 + $0x28] sm:$0xff] %v285
        %294 = vst [vmem:[%s179 + $0x30] sm:$0xff] %v286
        %295 = vst [vmem:[%s179 + $0x38] sm:$0xff] %v287
        %s296 = sand.u32 %s90, 1
        %s297 = scalar_lea.sflag [#allocation4], %s296
        %s298 = sand.u32 %s90, 1
        %s299 = smul.addr %s298, 64
        %s300 = scalar_lea.vmem [#allocation5], %s299
        // Predicated region
        $region33: #{tpu_custom_call.1} parent=27 // pred_check
          %p301 = pneg %p100
        $region34: #{tpu_custom_call.1} parent=27 // pred_check_branch
          %303 = sbr.rel (%p301) target = $region36
        $region35: #{tpu_custom_call.1} parent=27 // pred_region
          %s304 = smul.u32 2, %s24
          %s306 = ssub.s32 1024, 1024
          %307 = vsyncadd %s297, %s306
          %s308 = smul.addr %s23, 8
          %s309 = sadd.s32 %s304, %s308
          %s310 = smul.addr %s309, 128
          %s311 = scalar_lea.hbm %s2, %s310
          %s312 = sshll.u32 %s300, 4
          %s313 = int_to_ptr.vmem [resolvable:$true] %s312
          %318 = dma.vmem_to_hbm [thread:$0]  %s313, 1024, %s311, %s297, 256, 256, 16
        $region36: #{tpu_custom_call.1} parent=27 // pred_fallthru
          _
      $region28: #{tpu_custom_call.1} parent=5 // pred_fallthru
        _
      %p319 = scmp.le.s32.totalorder 2, %s14
      // Predicated region
      $region37: #{tpu_custom_call.1} parent=5 // pred_check
        %p320 = pneg %p319
      $region38: #{tpu_custom_call.1} parent=5 // pred_check_branch
        %322 = sbr.rel (%p320) target = $region40
      $region39: #{tpu_custom_call.1} parent=5 // pred_region
        %s323 = ssub.s32 %s14, 2
        // Predicated region
        $region41: #{tpu_custom_call.1} parent=39 // pred_check
          %p324 = pneg %p106
        $region42: #{tpu_custom_call.1} parent=39 // pred_check_branch
          %326 = sbr.rel (%p324) target = $region44
        $region43: #{tpu_custom_call.1} parent=39 // pred_region
          %s327 = sand.u32 %s91, 1
          %s328 = scalar_lea.sflag [#allocation4], %s327
          %s329 = sand.u32 %s91, 1
          %s330 = smul.addr %s329, 64
          %s331 = scalar_lea.vmem [#allocation5], %s330
          %332 = dma.done %s328, 1024
        $region44: #{tpu_custom_call.1} parent=39 // pred_fallthru
          _
      $region40: #{tpu_custom_call.1} parent=5 // pred_fallthru
        _
    $region6: #{tpu_custom_call.1} parent=1 // loop_footer
      %s18 = sadd.s32 1, %s14
    $region7: #{tpu_custom_call.1} parent=1 // loop_footer_branch
      %13 = sbr.rel target = $region3
    $region8: #{tpu_custom_call.1} parent=1 // loop_exit
      _
    %333 = vsyncpa [#allocation3], 1
    %s334 = scalar_lea.sflag [#allocation3], 1
    %335 = vsyncpa %s334, 1
    %336 = vsyncpa [#allocation4], 1
    %s337 = scalar_lea.sflag [#allocation4], 1
    %338 = vsyncpa %s337, 1

</llo_original>
